<compile_context>
chip_gen: v6e
topology: v6e:2x2x1
jax: 0.10.0
libtpu: 0.0.40
codegen_flags: <defaults>
</compile_context>

<pallas_src>
import math

import numpy as np
import jax
import jax.numpy as jnp
from jax.experimental import pallas as pl
from jax.experimental.pallas import tpu as pltpu


def mlp_kernel(xt_ref, w_in_t_ref, w_h_t_ref, w_v_t_ref, b_ref, o_ref):
    # b_ref packs: col 0 = b_in (64,), col 1 = b_h (64,), col 2 = b_v (bcast).
    # Linear(4 -> 64) + ReLU, batch on lanes: (64,4) @ (4,tb) -> (64,tb)
    h = jnp.dot(w_in_t_ref[...], xt_ref[...], preferred_element_type=jnp.float32)
    h = jnp.maximum(h + b_ref[:, 0:1], 0.0)

    # Folded hidden stack (exact affine composition of the six activation-free
    # linears 64->1024->...->64) + ReLU: (64,64) @ (64,tb) -> (64,tb)
    h = jnp.dot(w_h_t_ref[...], h, preferred_element_type=jnp.float32)
    h = jnp.maximum(h + b_ref[:, 1:2], 0.0)

    # Value head (64 -> 1): (1,64) @ (64,tb) -> (1,tb), lane-dense output.
    o_ref[...] = (jnp.dot(w_v_t_ref[...], h, preferred_element_type=jnp.float32)
                  + b_ref[0:1, 2:3])


def mlp_forward(x, packed_params, *, batch_tile=2048):
    """x: (B, 4) f32.  packed_params: (w_in_t, w_h_t, w_v_t, b_pack)."""
    w_in_t, w_h_t, w_v_t, b_pack = packed_params
    B, d_in = x.shape

    if B <= batch_tile:
        tb = B                     # single full-extent block (any B is legal)
    else:
        assert batch_tile % 128 == 0, "batch_tile must be lane-aligned (x128)"
        tb = batch_tile            # lane-aligned tiles, >=2 grid steps

    x_t = x.T                      # (4, B): batch on lanes

    out_t = pl.pallas_call(
        mlp_kernel,
        out_shape=jax.ShapeDtypeStruct((1, B), jnp.float32),
        grid=(pl.cdiv(B, tb),),
        in_specs=[
            pl.BlockSpec((d_in, tb), lambda i: (0, i)),   # activations stream
            pl.BlockSpec(w_in_t.shape, lambda i: (0, 0)), # weights stay resident
            pl.BlockSpec(w_h_t.shape, lambda i: (0, 0)),
            pl.BlockSpec(w_v_t.shape, lambda i: (0, 0)),
            pl.BlockSpec(b_pack.shape, lambda i: (0, 0)),
        ],
        out_specs=pl.BlockSpec((1, tb), lambda i: (0, i)),
        compiler_params=pltpu.CompilerParams(
            dimension_semantics=("parallel",)),
    )(x_t, w_in_t, w_h_t, w_v_t, b_pack)

    # (1, B) and (B, 1) share the same row-major flat layout.
    return out_t.reshape(B, 1)


def preprocess_params(params):
    """One-time host-side prep (amortized across all forward calls):
      * fold the six activation-free hidden linears in float64,
      * transpose weights for the batch-on-lanes layout,
      * pack the three biases into one (64, 3) array."""
    (w_in, b_in), *rest = params
    hidden, (w_v, b_v) = rest[:-1], rest[-1]

    # Exact affine composition, done in f64 to avoid f32 drift across the
    # 1024-wide contractions.
    w = np.asarray(hidden[0][0], np.float64)
    b = np.asarray(hidden[0][1], np.float64)
    for w_i, b_i in hidden[1:]:
        w_i = np.asarray(w_i, np.float64)
        b_i = np.asarray(b_i, np.float64)
        b = b @ w_i + b_i
        w = w @ w_i
    w_h, b_h = w, b                                   # (64, 64), (1, 64)

    w_in_t = jnp.asarray(np.asarray(w_in, np.float64).T, jnp.float32)  # (64, 4)
    w_h_t = jnp.asarray(w_h.T, jnp.float32)                            # (64, 64)
    w_v_t = jnp.asarray(np.asarray(w_v, np.float64).T, jnp.float32)    # (1, 64)

    b_pack = np.zeros((64, 3), np.float64)
    b_pack[:, 0] = np.asarray(b_in, np.float64).reshape(-1)
    b_pack[:, 1] = b_h.reshape(-1)
    b_pack[:, 2] = float(np.asarray(b_v, np.float64).reshape(-1)[0])
    return w_in_t, w_h_t, w_v_t, jnp.asarray(b_pack, jnp.float32)


def init_linear(key, fan_in, fan_out):
    """Mirror PyTorch's default U(-1/sqrt(fan_in), 1/sqrt(fan_in)) init.
    Stored as (in, out) so y = x @ W + b."""
    kw, kb = jax.random.split(key)
    bound = 1.0 / math.sqrt(fan_in)
    w = jax.random.uniform(kw, (fan_in, fan_out), jnp.float32, -bound, bound)
    b = jax.random.uniform(kb, (1, fan_out), jnp.float32, -bound, bound)
    return w, b


def reference_forward(x, params):
    """Pure-JAX reference on the ORIGINAL (unfolded) parameters."""
    (w_in, b_in), *rest = params
    hidden, (w_v, b_v) = rest[:-1], rest[-1]
    h = jnp.maximum(x @ w_in + b_in, 0.0)
    for w, b in hidden:
        h = h @ w + b
    h = jnp.maximum(h, 0.0)
    return h @ w_v + b_v


if __name__ == "__main__":
    key = jax.random.PRNGKey(0)
    keys = jax.random.split(key, 9)

    # Parameter shapes from __init__:
    #   linear: 4->64
    #   linear_h: 64->1024, 1024->1024 (x4), 1024->64
    #   value: 64->1
    layer_dims = [(4, 64),
                  (64, 1024), (1024, 1024), (1024, 1024),
                  (1024, 1024), (1024, 1024), (1024, 64),
                  (64, 1)]
    params = [init_linear(k, fi, fo) for k, (fi, fo) in zip(keys[:8], layer_dims)]

    packed = preprocess_params(params)

    # Small-batch check (single full-extent block).
    B = 8
    x = jax.random.normal(keys[8], (B, 4), jnp.float32)
    out = jax.block_until_ready(mlp_forward(x, packed))
    ref = reference_forward(x, params)
    assert out.shape == (B, 1), out.shape
    assert jnp.allclose(out, ref, atol=1e-3, rtol=1e-3), (
        "max abs diff:", float(jnp.max(jnp.abs(out - ref))))

    # Multi-tile check (3 grid steps, trailing partial block, masked writeback).
    B2 = 300
    x2 = jax.random.normal(jax.random.PRNGKey(1), (B2, 4), jnp.float32)
    out2 = jax.block_until_ready(mlp_forward(x2, packed, batch_tile=128))
    ref2 = reference_forward(x2, params)
    assert out2.shape == (B2, 1), out2.shape
    assert jnp.allclose(out2, ref2, atol=1e-3, rtol=1e-3), (
        "max abs diff:", float(jnp.max(jnp.abs(out2 - ref2))))

    print("KERNEL_OK")
</pallas_src>

<mosaic_0001>
module attributes {stable_mosaic.version = 11 : i64} {
  func.func @mlp_kernel(%arg0: i32, %arg1: memref<4x8xf32, #tpu.memory_space<vmem>>, %arg2: memref<64x4xf32, #tpu.memory_space<vmem>>, %arg3: memref<64x64xf32, #tpu.memory_space<vmem>>, %arg4: memref<1x64xf32, #tpu.memory_space<vmem>>, %arg5: memref<64x3xf32, #tpu.memory_space<vmem>>, %arg6: memref<1x8xf32, #tpu.memory_space<vmem>>) attributes {dimension_semantics = [#tpu.dimension_semantics<parallel>], iteration_bounds = array<i64: 1>, scalar_prefetch = 0 : i64, scratch_operands = 0 : i64, tpu.core_type = #tpu.core_type<tc>, window_params = [{transform_indices = @transform_0, window_bounds = array<i64: 4, 8>}, {pipeline_mode = #tpu.pipeline_mode<synchronous>, transform_indices = @transform_1, window_bounds = array<i64: 64, 4>}, {pipeline_mode = #tpu.pipeline_mode<synchronous>, transform_indices = @transform_2, window_bounds = array<i64: 64, 64>}, {pipeline_mode = #tpu.pipeline_mode<synchronous>, transform_indices = @transform_3, window_bounds = array<i64: 1, 64>}, {pipeline_mode = #tpu.pipeline_mode<synchronous>, transform_indices = @transform_4, window_bounds = array<i64: 64, 3>}, {transform_indices = @transform_5, window_bounds = array<i64: 1, 8>}]} {
    %c0 = arith.constant 0 : index
    %c0_0 = arith.constant 0 : index
    %0 = vector.load %arg2[%c0, %c0_0] : memref<64x4xf32, #tpu.memory_space<vmem>>, vector<64x4xf32>
    %c0_1 = arith.constant 0 : index
    %c0_2 = arith.constant 0 : index
    %1 = vector.load %arg1[%c0_1, %c0_2] : memref<4x8xf32, #tpu.memory_space<vmem>>, vector<4x8xf32>
    %cst = arith.constant dense<0.000000e+00> : vector<64x8xf32>
    %2 = tpu.matmul %0, %1, %cst {dimension_numbers = #tpu.dot_dimension_numbers<[1], [0], [0], [1], [0, 0, 1, 1], [], []>} : vector<64x4xf32>, vector<4x8xf32>, vector<64x8xf32> -> vector<64x8xf32>
    %c0_3 = arith.constant 0 : index
    %c0_4 = arith.constant 0 : index
    %3 = vector.load %arg5[%c0_3, %c0_4] : memref<64x3xf32, #tpu.memory_space<vmem>>, vector<64x1xf32>
    %4 = vector.broadcast %3 : vector<64x1xf32> to vector<64x8xf32>
    %5 = arith.addf %2, %4 : vector<64x8xf32>
    %cst_5 = arith.constant 0.000000e+00 : f32
    %6 = vector.broadcast %cst_5 : f32 to vector<64x8xf32>
    %7 = arith.maximumf %5, %6 : vector<64x8xf32>
    %c0_6 = arith.constant 0 : index
    %c0_7 = arith.constant 0 : index
    %8 = vector.load %arg3[%c0_6, %c0_7] : memref<64x64xf32, #tpu.memory_space<vmem>>, vector<64x64xf32>
    %cst_8 = arith.constant dense<0.000000e+00> : vector<64x8xf32>
    %9 = tpu.matmul %8, %7, %cst_8 {dimension_numbers = #tpu.dot_dimension_numbers<[1], [0], [0], [1], [0, 0, 1, 1], [], []>} : vector<64x64xf32>, vector<64x8xf32>, vector<64x8xf32> -> vector<64x8xf32>
    %c0_9 = arith.constant 0 : index
    %c1 = arith.constant 1 : index
    %10 = vector.load %arg5[%c0_9, %c1] : memref<64x3xf32, #tpu.memory_space<vmem>>, vector<64x1xf32>
    %11 = vector.broadcast %10 : vector<64x1xf32> to vector<64x8xf32>
    %12 = arith.addf %9, %11 : vector<64x8xf32>
    %cst_10 = arith.constant 0.000000e+00 : f32
    %13 = vector.broadcast %cst_10 : f32 to vector<64x8xf32>
    %14 = arith.maximumf %12, %13 : vector<64x8xf32>
    %c0_11 = arith.constant 0 : index
    %c0_12 = arith.constant 0 : index
    %15 = vector.load %arg4[%c0_11, %c0_12] : memref<1x64xf32, #tpu.memory_space<vmem>>, vector<1x64xf32>
    %cst_13 = arith.constant dense<0.000000e+00> : vector<1x8xf32>
    %16 = tpu.matmul %15, %14, %cst_13 {dimension_numbers = #tpu.dot_dimension_numbers<[1], [0], [0], [1], [0, 0, 1, 1], [], []>} : vector<1x64xf32>, vector<64x8xf32>, vector<1x8xf32> -> vector<1x8xf32>
    %c0_14 = arith.constant 0 : index
    %c2 = arith.constant 2 : index
    %17 = vector.load %arg5[%c0_14, %c2] : memref<64x3xf32, #tpu.memory_space<vmem>>, vector<1x1xf32>
    %18 = vector.broadcast %17 : vector<1x1xf32> to vector<1x8xf32>
    %19 = arith.addf %16, %18 : vector<1x8xf32>
    %c0_15 = arith.constant 0 : index
    %c0_16 = arith.constant 0 : index
    %20 = vector.load %arg6[%c0_15, %c0_16] : memref<1x8xf32, #tpu.memory_space<vmem>>, vector<1x8xf32>
    tpu.vector_store %arg6[%c0_15, %c0_16], %19 {strides = array<i32>} : memref<1x8xf32, #tpu.memory_space<vmem>>, vector<1x8xf32>,
    return
  }
  func.func @transform_0(%arg0: i32) -> (i32, i32) {
    %c0_i32 = arith.constant 0 : i32
    %c0_i32_0 = arith.constant 0 : i32
    return %c0_i32, %arg0 : i32, i32
  }
  func.func @transform_1(%arg0: i32) -> (i32, i32) {
    %c0_i32 = arith.constant 0 : i32
    %c0_i32_0 = arith.constant 0 : i32
    %c0_i32_1 = arith.constant 0 : i32
    return %c0_i32, %c0_i32_0 : i32, i32
  }
  func.func @transform_2(%arg0: i32) -> (i32, i32) {
    %c0_i32 = arith.constant 0 : i32
    %c0_i32_0 = arith.constant 0 : i32
    %c0_i32_1 = arith.constant 0 : i32
    return %c0_i32, %c0_i32_0 : i32, i32
  }
  func.func @transform_3(%arg0: i32) -> (i32, i32) {
    %c0_i32 = arith.constant 0 : i32
    %c0_i32_0 = arith.constant 0 : i32
    %c0_i32_1 = arith.constant 0 : i32
    return %c0_i32, %c0_i32_0 : i32, i32
  }
  func.func @transform_4(%arg0: i32) -> (i32, i32) {
    %c0_i32 = arith.constant 0 : i32
    %c0_i32_0 = arith.constant 0 : i32
    %c0_i32_1 = arith.constant 0 : i32
    return %c0_i32, %c0_i32_0 : i32, i32
  }
  func.func @transform_5(%arg0: i32) -> (i32, i32) {
    %c0_i32 = arith.constant 0 : i32
    %c0_i32_0 = arith.constant 0 : i32
    return %c0_i32, %arg0 : i32, i32
  }
}

</mosaic_0001>

<llo_original>
// kernel: tpu_custom_call.1
$region0: #{tpu_custom_call.1}
  #allocation0 [shape = 'u32[]', space=smem, size = 0x4, offset = 0x4, fixed_abs, tag = 'smem constant byte address 0x4 - core index']
  #allocation1 [shape = 'u32[144,128]{1,0:T(1,128)}', space=vmem, size = 0x12000, scoped, tag = 'internal scratch']
  %s0 = inlined_call_operand.vmem [shape: f32[4,8], index: 0, kind: input, shape index: {}]
  %s1 = inlined_call_operand.vmem [shape: f32[64,4], index: 1, kind: input, shape index: {}]
  %s2 = inlined_call_operand.vmem [shape: f32[64,64], index: 2, kind: input, shape index: {}]
  %s3 = inlined_call_operand.vmem [shape: f32[1,64], index: 3, kind: input, shape index: {}]
  %s4 = inlined_call_operand.vmem [shape: f32[64,3], index: 4, kind: input, shape index: {}]
  %s5 = inlined_call_operand.hbm [shape: f32[1,8], index: 5, kind: output, shape index: {}]
  %s6 = sld [smem:[#allocation0]]
  $region30: #{tpu_custom_call.1} parent=0
    _
  %s8 = ssub.s32 1, %s6
  %s9 = scalar_select 0, %s8, %s6
  $region1: #{tpu_custom_call.1} parent=0
    #allocation2 [shape = 'u8[512]{0}', space=vmem, size = 0x400, scoped, tag = 'output window, operand 0, single buffered']
    #allocation3 [shape = 's32[1]{0}', space=sflag, size = 0x4, scoped, tag = 'scoped memory for tpu_custom_call.1']
    %10 = vsyncpa [#allocation3], 0
    // Predicated region
    $region2: #{tpu_custom_call.1} parent=1 // pred_check
      _
    $region3: #{tpu_custom_call.1} parent=1 // pred_check_branch
      %12 = sbr.rel (0) target = $region5
    $region4: #{tpu_custom_call.1} parent=1 // pred_region
      _
    $region5: #{tpu_custom_call.1} parent=1 // pred_fallthru
      _
    // Predicated region
    $region6: #{tpu_custom_call.1} parent=1 // pred_check
      _
    $region7: #{tpu_custom_call.1} parent=1 // pred_check_branch
      %14 = sbr.rel (0) target = $region9
    $region8: #{tpu_custom_call.1} parent=1 // pred_region
      _
    $region9: #{tpu_custom_call.1} parent=1 // pred_fallthru
      _
    // Predicated region
    $region10: #{tpu_custom_call.1} parent=1 // pred_check
      _
    $region11: #{tpu_custom_call.1} parent=1 // pred_check_branch
      %16 = sbr.rel (0) target = $region13
    $region12: #{tpu_custom_call.1} parent=1 // pred_region
      _
    $region13: #{tpu_custom_call.1} parent=1 // pred_fallthru
      _
    // Predicated region
    $region14: #{tpu_custom_call.1} parent=1 // pred_check
      _
    $region15: #{tpu_custom_call.1} parent=1 // pred_check_branch
      %18 = sbr.rel (0) target = $region17
    $region16: #{tpu_custom_call.1} parent=1 // pred_region
      _
    $region17: #{tpu_custom_call.1} parent=1 // pred_fallthru
      _
    // Predicated region
    $region18: #{tpu_custom_call.1} parent=1 // pred_check
      _
    $region19: #{tpu_custom_call.1} parent=1 // pred_check_branch
      %20 = sbr.rel (0) target = $region21
    $region20: #{tpu_custom_call.1} parent=1 // pred_region
      _
    $region21: #{tpu_custom_call.1} parent=1 // pred_fallthru
      _
    %v21 = vld [vmem:[%s1] sm:$0xff]
    %v22 = vld [vmem:[%s1 + $0x8] sm:$0xff]
    %v23 = vld [vmem:[%s1 + $0x10] sm:$0xff]
    %v24 = vld [vmem:[%s1 + $0x18] sm:$0xff]
    %v25 = vld [vmem:[%s1 + $0x20] sm:$0xff]
    %v26 = vld [vmem:[%s1 + $0x28] sm:$0xff]
    %v27 = vld [vmem:[%s1 + $0x30] sm:$0xff]
    %v28 = vld [vmem:[%s1 + $0x38] sm:$0xff]
    %v29 = vld [vmem:[%s0] sm:$0xf]
    %v30 = vld [vmem:[%s4] sm:$0xff]
    %v31 = vld [vmem:[%s4 + $0x8] sm:$0xff]
    %v32 = vld [vmem:[%s4 + $0x10] sm:$0xff]
    %v33 = vld [vmem:[%s4 + $0x18] sm:$0xff]
    %v34 = vld [vmem:[%s4 + $0x20] sm:$0xff]
    %v35 = vld [vmem:[%s4 + $0x28] sm:$0xff]
    %v36 = vld [vmem:[%s4 + $0x30] sm:$0xff]
    %v37 = vld [vmem:[%s4 + $0x38] sm:$0xff]
    %39 = vset.pattern.permute.xlu0 0
    %40 = vperm.xlu0 %39, %v30
    %v41 = vpop.permute.xlu0 %40
    %44 = vset.pattern.permute.xlu0 0
    %45 = vperm.xlu0 %44, %v31
    %v46 = vpop.permute.xlu0 %45
    %49 = vset.pattern.permute.xlu0 0
    %50 = vperm.xlu0 %49, %v32
    %v51 = vpop.permute.xlu0 %50
    %54 = vset.pattern.permute.xlu0 0
    %55 = vperm.xlu0 %54, %v33
    %v56 = vpop.permute.xlu0 %55
    %59 = vset.pattern.permute.xlu0 0
    %60 = vperm.xlu0 %59, %v34
    %v61 = vpop.permute.xlu0 %60
    %64 = vset.pattern.permute.xlu0 0
    %65 = vperm.xlu0 %64, %v35
    %v66 = vpop.permute.xlu0 %65
    %69 = vset.pattern.permute.xlu0 0
    %70 = vperm.xlu0 %69, %v36
    %v71 = vpop.permute.xlu0 %70
    %74 = vset.pattern.permute.xlu0 0
    %75 = vperm.xlu0 %74, %v37
    %v76 = vpop.permute.xlu0 %75
    %vm78 = vcmask 31744
    %v80 = vsel %vm78, %v21, 0
    %v83 = vsel %vm78, %v22, 0
    %v86 = vsel %vm78, %v23, 0
    %v89 = vsel %vm78, %v24, 0
    %v92 = vsel %vm78, %v25, 0
    %v95 = vsel %vm78, %v26, 0
    %v98 = vsel %vm78, %v27, 0
    %v101 = vsel %vm78, %v28, 0
    %vm103 = vcmask 1043456
    %v105 = vsel %vm103, %v29, 0
    %107 = vmatprep.subr.mxu0 0.0
    %108 = vmatpush1.msra.mxu0 0.0
    %109 = vmatprep.subr.mxu0 0.0
    %110 = vmatpush1.msra.mxu0 0.0
    %111 = vmatprep.subr.mxu0 0.0
    %112 = vmatpush1.msra.mxu0 0.0
    %113 = vmatprep.subr.mxu0 0.0
    %114 = vmatpush1.msra.mxu0 0.0
    %115 = vmatprep.subr.mxu0 0.0
    %116 = vmatpush1.msra.mxu0 0.0
    %117 = vmatprep.subr.mxu0 0.0
    %118 = vmatpush1.msra.mxu0 0.0
    %119 = vmatprep.subr.mxu0 0.0
    %120 = vmatpush1.msra.mxu0 0.0
    %121 = vmatprep.subr.mxu0 0.0
    %122 = vmatpush1.msra.mxu0 0.0
    %123 = vmatprep.subr.mxu0 0.0
    %124 = vmatpush1.msra.mxu0 0.0
    %125 = vmatprep.subr.mxu0 0.0
    %126 = vmatpush1.msra.mxu0 0.0
    %127 = vmatprep.subr.mxu0 0.0
    %128 = vmatpush1.msra.mxu0 0.0
    %129 = vmatprep.subr.mxu0 0.0
    %130 = vmatpush1.msra.mxu0 0.0
    %131 = vmatprep.subr.mxu0 0.0
    %132 = vmatpush1.msra.mxu0 0.0
    %133 = vmatprep.subr.mxu0 0.0
    %134 = vmatpush1.msra.mxu0 0.0
    %135 = vmatprep.subr.mxu0 0.0
    %136 = vmatpush1.msra.mxu0 0.0
    %137 = vmatprep.subr.mxu0 0.0
    %138 = vmatpush1.msra.mxu0 %v105
    %139 = vmatprep.subr.mxu0 0.0
    %140 = vmatpush2.msra.mxu0 0.0
    %141 = vmatprep.subr.mxu0 0.0
    %142 = vmatpush2.msra.mxu0 0.0
    %143 = vmatprep.subr.mxu0 0.0
    %144 = vmatpush2.msra.mxu0 0.0
    %145 = vmatprep.subr.mxu0 0.0
    %146 = vmatpush2.msra.mxu0 0.0
    %147 = vmatprep.subr.mxu0 0.0
    %148 = vmatpush2.msra.mxu0 0.0
    %149 = vmatprep.subr.mxu0 0.0
    %150 = vmatpush2.msra.mxu0 0.0
    %151 = vmatprep.subr.mxu0 0.0
    %152 = vmatpush2.msra.mxu0 0.0
    %153 = vmatprep.subr.mxu0 0.0
    %154 = vmatpush2.msra.mxu0 0.0
    %155 = vmatprep.subr.mxu0 0.0
    %156 = vmatpush2.msra.mxu0 0.0
    %157 = vmatprep.subr.mxu0 0.0
    %158 = vmatpush2.msra.mxu0 0.0
    %159 = vmatprep.subr.mxu0 0.0
    %160 = vmatpush2.msra.mxu0 0.0
    %161 = vmatprep.subr.mxu0 0.0
    %162 = vmatpush2.msra.mxu0 0.0
    %163 = vmatprep.subr.mxu0 0.0
    %164 = vmatpush2.msra.mxu0 0.0
    %165 = vmatprep.subr.mxu0 0.0
    %166 = vmatpush2.msra.mxu0 0.0
    %167 = vmatprep.subr.mxu0 0.0
    %168 = vmatpush2.msra.mxu0 0.0
    %169 = vmatprep.subr.mxu0 0.0
    %170 = vmatpush2.msra.mxu0 0.0
    %171 = vmatprep.mubr.f32.mxu0 0.0
    %172 = vmatmul.mubr.f32.gmra.mxu0 %v80
    %v173 = vpop.f32.mrf.mxu0
    %v174 = vadd.f32 %v41, %v173
    %v175 = vpop.f32.mrf.mxu0
    %176 = vmatprep.mubr.f32.mxu0 0.0
    %177 = vmatmul.mubr.f32.gmra.mxu0 %v83
    %v178 = vpop.f32.mrf.mxu0
    %v179 = vadd.f32 %v46, %v178
    %v180 = vpop.f32.mrf.mxu0
    %181 = vmatprep.mubr.f32.mxu0 0.0
    %182 = vmatmul.mubr.f32.gmra.mxu0 %v86
    %v183 = vpop.f32.mrf.mxu0
    %v184 = vadd.f32 %v51, %v183
    %v185 = vpop.f32.mrf.mxu0
    %186 = vmatprep.mubr.f32.mxu0 0.0
    %187 = vmatmul.mubr.f32.gmra.mxu0 %v89
    %v188 = vpop.f32.mrf.mxu0
    %v189 = vadd.f32 %v56, %v188
    %v190 = vpop.f32.mrf.mxu0
    %191 = vmatprep.mubr.f32.mxu0 0.0
    %192 = vmatmul.mubr.f32.gmra.mxu0 %v92
    %v193 = vpop.f32.mrf.mxu0
    %v194 = vadd.f32 %v61, %v193
    %v195 = vpop.f32.mrf.mxu0
    %196 = vmatprep.mubr.f32.mxu0 0.0
    %197 = vmatmul.mubr.f32.gmra.mxu0 %v95
    %v198 = vpop.f32.mrf.mxu0
    %v199 = vadd.f32 %v66, %v198
    %v200 = vpop.f32.mrf.mxu0
    %201 = vmatprep.mubr.f32.mxu0 0.0
    %202 = vmatmul.mubr.f32.gmra.mxu0 %v98
    %v203 = vpop.f32.mrf.mxu0
    %v204 = vadd.f32 %v71, %v203
    %v205 = vpop.f32.mrf.mxu0
    %206 = vmatprep.mubr.f32.mxu0 0.0
    %207 = vmatmul.mubr.f32.gmra.mxu0 %v101
    %v208 = vpop.f32.mrf.mxu0
    %v209 = vadd.f32 %v76, %v208
    %v210 = vpop.f32.mrf.mxu0
    %211 = vdwg.mxu0
    %v212 = vmax.f32 %v174, 0.0
    %v213 = vmax.f32 %v179, 0.0
    %v214 = vmax.f32 %v184, 0.0
    %v215 = vmax.f32 %v189, 0.0
    %v216 = vmax.f32 %v194, 0.0
    %v217 = vmax.f32 %v199, 0.0
    %v218 = vmax.f32 %v204, 0.0
    %v219 = vmax.f32 %v209, 0.0
    %v220 = vld [vmem:[%s2] sm:$0xff]
    %v221 = vld [vmem:[%s2 + $0x8] sm:$0xff]
    %v222 = vld [vmem:[%s2 + $0x10] sm:$0xff]
    %v223 = vld [vmem:[%s2 + $0x18] sm:$0xff]
    %v224 = vld [vmem:[%s2 + $0x20] sm:$0xff]
    %v225 = vld [vmem:[%s2 + $0x28] sm:$0xff]
    %v226 = vld [vmem:[%s2 + $0x30] sm:$0xff]
    %v227 = vld [vmem:[%s2 + $0x38] sm:$0xff]
    %228 = vset.pattern.permute.xlu0 1
    %229 = vperm.xlu0 %228, %v30
    %v230 = vpop.permute.xlu0 %229
    %232 = vset.pattern.permute.xlu0 1
    %233 = vperm.xlu0 %232, %v31
    %v234 = vpop.permute.xlu0 %233
    %236 = vset.pattern.permute.xlu0 1
    %237 = vperm.xlu0 %236, %v32
    %v238 = vpop.permute.xlu0 %237
    %240 = vset.pattern.permute.xlu0 1
    %241 = vperm.xlu0 %240, %v33
    %v242 = vpop.permute.xlu0 %241
    %244 = vset.pattern.permute.xlu0 1
    %245 = vperm.xlu0 %244, %v34
    %v246 = vpop.permute.xlu0 %245
    %248 = vset.pattern.permute.xlu0 1
    %249 = vperm.xlu0 %248, %v35
    %v250 = vpop.permute.xlu0 %249
    %252 = vset.pattern.permute.xlu0 1
    %253 = vperm.xlu0 %252, %v36
    %v254 = vpop.permute.xlu0 %253
    %256 = vset.pattern.permute.xlu0 1
    %257 = vperm.xlu0 %256, %v37
    %v258 = vpop.permute.xlu0 %257
    %vm260 = vcmask 523264
    %v262 = vsel %vm260, %v220, 0
    %v265 = vsel %vm260, %v221, 0
    %v268 = vsel %vm260, %v222, 0
    %v271 = vsel %vm260, %v223, 0
    %v274 = vsel %vm260, %v224, 0
    %v277 = vsel %vm260, %v225, 0
    %v280 = vsel %vm260, %v226, 0
    %v283 = vsel %vm260, %v227, 0
    %285 = vmatprep.subr.mxu0 0.0
    %286 = vmatpush1.msra.mxu0 0.0
    %287 = vmatprep.subr.mxu0 0.0
    %288 = vmatpush1.msra.mxu0 0.0
    %289 = vmatprep.subr.mxu0 0.0
    %290 = vmatpush1.msra.mxu0 0.0
    %291 = vmatprep.subr.mxu0 0.0
    %292 = vmatpush1.msra.mxu0 0.0
    %293 = vmatprep.subr.mxu0 0.0
    %294 = vmatpush1.msra.mxu0 0.0
    %295 = vmatprep.subr.mxu0 0.0
    %296 = vmatpush1.msra.mxu0 0.0
    %297 = vmatprep.subr.mxu0 0.0
    %298 = vmatpush1.msra.mxu0 0.0
    %299 = vmatprep.subr.mxu0 0.0
    %300 = vmatpush1.msra.mxu0 0.0
    %301 = vmatprep.subr.mxu0 0.0
    %302 = vmatpush1.msra.mxu0 %v219
    %303 = vmatprep.subr.mxu0 0.0
    %304 = vmatpush1.msra.mxu0 %v218
    %305 = vmatprep.subr.mxu0 0.0
    %306 = vmatpush1.msra.mxu0 %v217
    %307 = vmatprep.subr.mxu0 0.0
    %308 = vmatpush1.msra.mxu0 %v216
    %309 = vmatprep.subr.mxu0 0.0
    %310 = vmatpush1.msra.mxu0 %v215
    %311 = vmatprep.subr.mxu0 0.0
    %312 = vmatpush1.msra.mxu0 %v214
    %313 = vmatprep.subr.mxu0 0.0
    %314 = vmatpush1.msra.mxu0 %v213
    %315 = vmatprep.subr.mxu0 0.0
    %316 = vmatpush1.msra.mxu0 %v212
    %317 = vmatprep.subr.mxu0 0.0
    %318 = vmatpush2.msra.mxu0 0.0
    %319 = vmatprep.subr.mxu0 0.0
    %320 = vmatpush2.msra.mxu0 0.0
    %321 = vmatprep.subr.mxu0 0.0
    %322 = vmatpush2.msra.mxu0 0.0
    %323 = vmatprep.subr.mxu0 0.0
    %324 = vmatpush2.msra.mxu0 0.0
    %325 = vmatprep.subr.mxu0 0.0
    %326 = vmatpush2.msra.mxu0 0.0
    %327 = vmatprep.subr.mxu0 0.0
    %328 = vmatpush2.msra.mxu0 0.0
    %329 = vmatprep.subr.mxu0 0.0
    %330 = vmatpush2.msra.mxu0 0.0
    %331 = vmatprep.subr.mxu0 0.0
    %332 = vmatpush2.msra.mxu0 0.0
    %333 = vmatprep.subr.mxu0 0.0
    %334 = vmatpush2.msra.mxu0 0.0
    %335 = vmatprep.subr.mxu0 0.0
    %336 = vmatpush2.msra.mxu0 0.0
    %337 = vmatprep.subr.mxu0 0.0
    %338 = vmatpush2.msra.mxu0 0.0
    %339 = vmatprep.subr.mxu0 0.0
    %340 = vmatpush2.msra.mxu0 0.0
    %341 = vmatprep.subr.mxu0 0.0
    %342 = vmatpush2.msra.mxu0 0.0
    %343 = vmatprep.subr.mxu0 0.0
    %344 = vmatpush2.msra.mxu0 0.0
    %345 = vmatprep.subr.mxu0 0.0
    %346 = vmatpush2.msra.mxu0 0.0
    %347 = vmatprep.subr.mxu0 0.0
    %348 = vmatpush2.msra.mxu0 0.0
    %349 = vmatprep.mubr.f32.mxu0 0.0
    %350 = vmatmul.mubr.f32.gmra.mxu0 %v262
    %v351 = vpop.f32.mrf.mxu0
    %v352 = vadd.f32 %v230, %v351
    %v353 = vpop.f32.mrf.mxu0
    %354 = vmatprep.mubr.f32.mxu0 0.0
    %355 = vmatmul.mubr.f32.gmra.mxu0 %v265
    %v356 = vpop.f32.mrf.mxu0
    %v357 = vadd.f32 %v234, %v356
    %v358 = vpop.f32.mrf.mxu0
    %359 = vmatprep.mubr.f32.mxu0 0.0
    %360 = vmatmul.mubr.f32.gmra.mxu0 %v268
    %v361 = vpop.f32.mrf.mxu0
    %v362 = vadd.f32 %v238, %v361
    %v363 = vpop.f32.mrf.mxu0
    %364 = vmatprep.mubr.f32.mxu0 0.0
    %365 = vmatmul.mubr.f32.gmra.mxu0 %v271
    %v366 = vpop.f32.mrf.mxu0
    %v367 = vadd.f32 %v242, %v366
    %v368 = vpop.f32.mrf.mxu0
    %369 = vmatprep.mubr.f32.mxu0 0.0
    %370 = vmatmul.mubr.f32.gmra.mxu0 %v274
    %v371 = vpop.f32.mrf.mxu0
    %v372 = vadd.f32 %v246, %v371
    %v373 = vpop.f32.mrf.mxu0
    %374 = vmatprep.mubr.f32.mxu0 0.0
    %375 = vmatmul.mubr.f32.gmra.mxu0 %v277
    %v376 = vpop.f32.mrf.mxu0
    %v377 = vadd.f32 %v250, %v376
    %v378 = vpop.f32.mrf.mxu0
    %379 = vmatprep.mubr.f32.mxu0 0.0
    %380 = vmatmul.mubr.f32.gmra.mxu0 %v280
    %v381 = vpop.f32.mrf.mxu0
    %v382 = vadd.f32 %v254, %v381
    %v383 = vpop.f32.mrf.mxu0
    %384 = vmatprep.mubr.f32.mxu0 0.0
    %385 = vmatmul.mubr.f32.gmra.mxu0 %v283
    %v386 = vpop.f32.mrf.mxu0
    %v387 = vadd.f32 %v258, %v386
    %v388 = vpop.f32.mrf.mxu0
    %389 = vdwg.mxu0
    %v390 = vmax.f32 %v352, 0.0
    %v391 = vmax.f32 %v357, 0.0
    %v392 = vmax.f32 %v362, 0.0
    %v393 = vmax.f32 %v367, 0.0
    %v394 = vmax.f32 %v372, 0.0
    %v395 = vmax.f32 %v377, 0.0
    %v396 = vmax.f32 %v382, 0.0
    %v397 = vmax.f32 %v387, 0.0
    %v398 = vld [vmem:[%s3] sm:$0x1]
    %v399 = vld [vmem:[%s4] sm:$0x1]
    %401 = vset.pattern.permute.xlu0 2
    %402 = vperm.xlu0 %401, %v399
    %v403 = vpop.permute.xlu0 %402
    %v406 = vsel %vm260, %v398, 0
    %408 = vmatprep.subr.mxu0 0.0
    %409 = vmatpush1.msra.mxu0 0.0
    %410 = vmatprep.subr.mxu0 0.0
    %411 = vmatpush1.msra.mxu0 0.0
    %412 = vmatprep.subr.mxu0 0.0
    %413 = vmatpush1.msra.mxu0 0.0
    %414 = vmatprep.subr.mxu0 0.0
    %415 = vmatpush1.msra.mxu0 0.0
    %416 = vmatprep.subr.mxu0 0.0
    %417 = vmatpush1.msra.mxu0 0.0
    %418 = vmatprep.subr.mxu0 0.0
    %419 = vmatpush1.msra.mxu0 0.0
    %420 = vmatprep.subr.mxu0 0.0
    %421 = vmatpush1.msra.mxu0 0.0
    %422 = vmatprep.subr.mxu0 0.0
    %423 = vmatpush1.msra.mxu0 0.0
    %424 = vmatprep.subr.mxu0 0.0
    %425 = vmatpush1.msra.mxu0 %v397
    %426 = vmatprep.subr.mxu0 0.0
    %427 = vmatpush1.msra.mxu0 %v396
    %428 = vmatprep.subr.mxu0 0.0
    %429 = vmatpush1.msra.mxu0 %v395
    %430 = vmatprep.subr.mxu0 0.0
    %431 = vmatpush1.msra.mxu0 %v394
    %432 = vmatprep.subr.mxu0 0.0
    %433 = vmatpush1.msra.mxu0 %v393
    %434 = vmatprep.subr.mxu0 0.0
    %435 = vmatpush1.msra.mxu0 %v392
    %436 = vmatprep.subr.mxu0 0.0
    %437 = vmatpush1.msra.mxu0 %v391
    %438 = vmatprep.subr.mxu0 0.0
    %439 = vmatpush1.msra.mxu0 %v390
    %440 = vmatprep.subr.mxu0 0.0
    %441 = vmatpush2.msra.mxu0 0.0
    %442 = vmatprep.subr.mxu0 0.0
    %443 = vmatpush2.msra.mxu0 0.0
    %444 = vmatprep.subr.mxu0 0.0
    %445 = vmatpush2.msra.mxu0 0.0
    %446 = vmatprep.subr.mxu0 0.0
    %447 = vmatpush2.msra.mxu0 0.0
    %448 = vmatprep.subr.mxu0 0.0
    %449 = vmatpush2.msra.mxu0 0.0
    %450 = vmatprep.subr.mxu0 0.0
    %451 = vmatpush2.msra.mxu0 0.0
    %452 = vmatprep.subr.mxu0 0.0
    %453 = vmatpush2.msra.mxu0 0.0
    %454 = vmatprep.subr.mxu0 0.0
    %455 = vmatpush2.msra.mxu0 0.0
    %456 = vmatprep.subr.mxu0 0.0
    %457 = vmatpush2.msra.mxu0 0.0
    %458 = vmatprep.subr.mxu0 0.0
    %459 = vmatpush2.msra.mxu0 0.0
    %460 = vmatprep.subr.mxu0 0.0
    %461 = vmatpush2.msra.mxu0 0.0
    %462 = vmatprep.subr.mxu0 0.0
    %463 = vmatpush2.msra.mxu0 0.0
    %464 = vmatprep.subr.mxu0 0.0
    %465 = vmatpush2.msra.mxu0 0.0
    %466 = vmatprep.subr.mxu0 0.0
    %467 = vmatpush2.msra.mxu0 0.0
    %468 = vmatprep.subr.mxu0 0.0
    %469 = vmatpush2.msra.mxu0 0.0
    %470 = vmatprep.subr.mxu0 0.0
    %471 = vmatpush2.msra.mxu0 0.0
    %472 = vmatprep.mubr.f32.mxu0 0.0
    %473 = vmatmul.mubr.f32.gmra.mxu0 %v406
    %v474 = vpop.f32.mrf.mxu0
    %v475 = vadd.f32 %v403, %v474
    %v476 = vpop.f32.mrf.mxu0
    %477 = vdwg.mxu0
    %vm478 = vcmask 57344
    %479 = vst.msk [vmem:[#allocation2] sm:$0x1] %vm478, %v475
    // Predicated region
    $region22: #{tpu_custom_call.1} parent=1 // pred_check
      _
    $region23: #{tpu_custom_call.1} parent=1 // pred_check_branch
      %481 = sbr.rel (0) target = $region25
    $region24: #{tpu_custom_call.1} parent=1 // pred_region
      %s483 = ssub.s32 16, 16
      %484 = vsyncadd [#allocation3], %s483
      %s486 = sshll.u32 [#allocation2], 4
      %s487 = int_to_ptr.vmem [resolvable:$true] %s486
      %489 = dma.vmem_to_hbm [thread:$0]  %s487, 16, %s5, [#allocation3]
    $region25: #{tpu_custom_call.1} parent=1 // pred_fallthru
      _
    // Predicated region
    $region26: #{tpu_custom_call.1} parent=1 // pred_check
      _
    $region27: #{tpu_custom_call.1} parent=1 // pred_check_branch
      %491 = sbr.rel (0) target = $region29
    $region28: #{tpu_custom_call.1} parent=1 // pred_region
      %492 = dma.done [#allocation3], 16
    $region29: #{tpu_custom_call.1} parent=1 // pred_fallthru
      _
    %493 = vsyncpa [#allocation3], 1

</llo_original>
